<compile_context>
chip_gen: v6e
topology: v6e:2x2x1
jax: 0.10.0
libtpu: 0.0.40
codegen_flags: <defaults>
</compile_context>

<pallas_src>
import jax
import jax.numpy as jnp
from jax.experimental import pallas as pl
from jax.experimental.pallas import tpu as pltpu

GAMMA = 2.0          # focal exponent (== 2 -> explicit square, no jnp.power)
ALPHA = 0.25
FOCAL_WEIGHT = 0.95
BCE_WEIGHT = 0.05
# class_weights=None in the module -> no pos_weight term.


def _tensorcores_per_device():
    """Best-effort: 2 TensorCores per device on v7x, else 1."""
    try:
        kind = jax.devices()[0].device_kind.lower()
    except Exception:
        return 1
    return 2 if ("v7" in kind or "tpu7" in kind) else 1


def combined_loss(inputs, targets, *, max_block_rows=1024):
    """inputs/targets: same-shape arrays (logits / targets, any dtype).
    Returns the scalar f32 CombinedLoss (mean reduction)."""
    assert inputs.shape == targets.shape
    total = int(inputs.size)
    assert 0 < total < 2 ** 31, "element indices are tracked in int32"

    x = inputs.reshape(-1)          # contiguous reshape == bitcast, no copy
    t = targets.reshape(-1)         # native dtype; the f32 cast happens in-kernel

    # Widest lane count that divides total keeps the 2D reshape a zero-copy
    # bitcast; otherwise fall back to 1024 lanes plus a small (< lane) tail pad.
    lane = 1024
    for cand in (1024, 512, 256, 128):
        if total % cand == 0:
            lane = cand
            break
    rows = pl.cdiv(total, lane)
    pad = rows * lane - total
    if pad:
        # Ragged tail only.  Pad values are irrelevant: the kernel masks every
        # element index >= total.
        # TODO(synk): a manual-DMA kernel over the flat 1-D HBM buffer would
        # avoid even this single copy for ragged sizes.
        x = jnp.pad(x, (0, pad))
        t = jnp.pad(t, (0, pad))
    x2d = x.reshape(rows, lane)
    t2d = t.reshape(rows, lane)

    # Block rows: multiple of 8 (or the full row count when rows < 8), capped so
    # an f32 input tile stays at ~max_block_rows*1024 elements (~4 MiB default).
    row_cap = max(8, (max_block_rows * 1024 // lane) // 8 * 8)
    if rows < 8:
        block_rows = rows                        # equals the full dim -> legal
    else:
        block_rows = min(row_cap, (rows // 8) * 8)
    total_blocks = pl.cdiv(rows, block_rows)
    fold = 8 if block_rows % 8 == 0 else block_rows   # accumulator sublane rows
    block_elems = block_rows * lane

    # Split the block range across TensorCores on multi-core chips (v7x only).
    n_cores = _tensorcores_per_device()
    np_eff = 2 if (n_cores >= 2 and total_blocks >= 2) else 1
    blocks_per_core = pl.cdiv(total_blocks, np_eff)
    clamp = np_eff * blocks_per_core > total_blocks    # at most one duplicate step

    def kernel(x_ref, t_ref, out_ref):
        c = pl.program_id(0)
        i = pl.program_id(1)

        @pl.when(i == 0)
        def _():
            out_ref[...] = jnp.zeros_like(out_ref)

        bi = c * blocks_per_core + i                   # intended block index
        is_dup = bi >= total_blocks                    # clamped duplicate step
        bi_real = jnp.minimum(bi, total_blocks - 1) if clamp else bi
        elem_start = bi_real * block_elems

        xv = x_ref[...].astype(jnp.float32)
        tv = t_ref[...].astype(jnp.float32)

        # Numerically stable BCEWithLogits (matches torch.nn.BCEWithLogitsLoss):
        #   bce = max(x, 0) - x*t + log1p(exp(-|x|))
        bce = jnp.maximum(xv, 0.0) - xv * tv + jnp.log1p(jnp.exp(-jnp.abs(xv)))

        # Focal modulation: pt = exp(-bce); (1 - pt)^gamma with gamma == 2.
        pt = jnp.exp(-bce)
        one_m_pt = 1.0 - pt

        # Fused weighted loss: 0.95 * alpha * (1-pt)^2 * bce + 0.05 * bce
        combined = bce * (FOCAL_WEIGHT * ALPHA * one_m_pt * one_m_pt + BCE_WEIGHT)

        needs_mask = jnp.logical_or(is_dup, elem_start + block_elems > total)

        @pl.when(jnp.logical_not(needs_mask))
        def _():
            # Interior fast path: whole tile valid; fold onto the resident
            # (fold, lane) accumulator with pure VPU adds (no cross-lane work).
            out_ref[...] += combined.reshape(
                block_rows // fold, fold, lane).sum(axis=0)[None]

        @pl.when(needs_mask)
        def _():
            # Boundary path: mask element indices >= total (ragged tail, the
            # out-of-range rows of a partial last block, or a duplicate step).
            rid = jax.lax.broadcasted_iota(jnp.int32, (block_rows, lane), 0)
            cid = jax.lax.broadcasted_iota(jnp.int32, (block_rows, lane), 1)
            local = rid * lane + cid
            valid = jnp.logical_and(local < (total - elem_start),
                                    jnp.logical_not(is_dup))
            masked = jnp.where(valid, combined, 0.0)
            out_ref[...] += masked.reshape(
                block_rows // fold, fold, lane).sum(axis=0)[None]

    if clamp:
        def in_map(c, i):
            return (jnp.minimum(c * blocks_per_core + i, total_blocks - 1), 0)
    else:
        def in_map(c, i):
            return (c * blocks_per_core + i, 0)

    # Explicit VMEM budget: double-buffered native-dtype input tiles + resident
    # accumulator blocks + slack; floor at v5e's 16 MiB default, cap at 48 MiB.
    in_bytes = block_rows * lane * (x2d.dtype.itemsize + t2d.dtype.itemsize)
    out_bytes = fold * lane * 4
    need = 2 * in_bytes + 2 * out_bytes
    vmem_limit = int(min(max(need + need // 2 + (1 << 20), 16 << 20), 48 << 20))

    if np_eff == 2:
        dims = (pltpu.CORE_PARALLEL, pltpu.ARBITRARY)   # shard across both v7x TCs
    else:
        dims = ("parallel", "arbitrary")

    partials = pl.pallas_call(
        kernel,
        out_shape=jax.ShapeDtypeStruct((np_eff, fold, lane), jnp.float32),
        grid_spec=pltpu.PrefetchScalarGridSpec(
            num_scalar_prefetch=0,
            grid=(np_eff, blocks_per_core),
            in_specs=[
                pl.BlockSpec((block_rows, lane), in_map),
                pl.BlockSpec((block_rows, lane), in_map),
            ],
            out_specs=pl.BlockSpec((1, fold, lane), lambda c, i: (c, 0, 0)),
        ),
        compiler_params=pltpu.CompilerParams(
            dimension_semantics=dims,
            vmem_limit_bytes=vmem_limit,
        ),
    )(x2d, t2d)

    # Tiny final cross-lane reduction + mean scale in JAX glue.
    return jnp.sum(partials) * (1.0 / float(total))


def combined_loss_ref(inputs, targets):
    x = inputs.astype(jnp.float32)
    t = targets.astype(jnp.float32)
    bce = jnp.maximum(x, 0.0) - x * t + jnp.log1p(jnp.exp(-jnp.abs(x)))
    pt = jnp.exp(-bce)
    focal = ALPHA * (1.0 - pt) ** GAMMA * bce
    return FOCAL_WEIGHT * jnp.mean(focal) + BCE_WEIGHT * jnp.mean(bce)


if __name__ == "__main__":
    key = jax.random.PRNGKey(0)
    k1, k2, k3, k4, k5, k6, k7 = jax.random.split(key, 7)

    # Case 1: lane-aligned size (zero-copy path), hard f32 targets.
    shape1 = (2, 4, 16, 16)                     # N, C, H, W -> 2048 elements
    x1 = jax.random.normal(k1, shape1, dtype=jnp.float32) * 2.0
    t1_hard = (jax.random.uniform(k2, shape1) > 0.5).astype(jnp.float32)
    out1 = jax.block_until_ready(combined_loss(x1, t1_hard))
    ref1 = combined_loss_ref(x1, t1_hard)
    assert jnp.allclose(out1, ref1, rtol=1e-5, atol=1e-6), (out1, ref1)

    # Case 2: soft targets streamed in native bf16 (cast to f32 in-kernel).
    t1_soft = jax.random.uniform(k3, shape1, dtype=jnp.bfloat16)
    out2 = jax.block_until_ready(combined_loss(x1, t1_soft))
    ref2 = combined_loss_ref(x1, t1_soft)
    assert jnp.allclose(out2, ref2, rtol=1e-5, atol=1e-6), (out2, ref2)

    # Case 3: ragged element count -> exercises the boundary-mask path.
    shape3 = (3, 5, 17, 13)                     # 3315 elements, not lane aligned
    x3 = jax.random.normal(k4, shape3, dtype=jnp.float32)
    t3 = (jax.random.uniform(k5, shape3) > 0.5).astype(jnp.float32)
    out3 = jax.block_until_ready(combined_loss(x3, t3))
    ref3 = combined_loss_ref(x3, t3)
    assert jnp.allclose(out3, ref3, rtol=1e-5, atol=1e-6), (out3, ref3)

    # Case 4: multi-block streaming accumulation (partial last block); on v7x
    # this also exercises the CORE_PARALLEL two-core split.
    shape4 = (1, 33, 32, 32)                    # 33792 elements -> 33 rows of 1024
    x4 = jax.random.normal(k6, shape4, dtype=jnp.float32)
    t4 = jax.random.uniform(k7, shape4, dtype=jnp.float32)
    out4 = jax.block_until_ready(combined_loss(x4, t4, max_block_rows=8))
    ref4 = combined_loss_ref(x4, t4)
    assert jnp.allclose(out4, ref4, rtol=1e-5, atol=1e-6), (out4, ref4)

    print("KERNEL_OK")
</pallas_src>

<mosaic_0001>
module attributes {stable_mosaic.version = 11 : i64} {
  func.func @kernel(%arg0: i32, %arg1: i32, %arg2: memref<2x1024xf32, #tpu.memory_space<vmem>>, %arg3: memref<2x1024xf32, #tpu.memory_space<vmem>>, %arg4: memref<1x2x1024xf32, #tpu.memory_space<vmem>>) attributes {dimension_semantics = [#tpu.dimension_semantics<parallel>, #tpu.dimension_semantics<arbitrary>], iteration_bounds = array<i64: 1, 1>, scalar_prefetch = 0 : i64, scratch_operands = 0 : i64, tpu.core_type = #tpu.core_type<tc>, window_params = [{transform_indices = @transform_0, window_bounds = array<i64: 2, 1024>}, {transform_indices = @transform_1, window_bounds = array<i64: 2, 1024>}, {transform_indices = @transform_2, window_bounds = array<i64: 1, 2, 1024>}]} {
    %c0_i32 = arith.constant 0 : i32
    %0 = arith.cmpi eq, %arg1, %c0_i32 : i32
    %1 = arith.extui %0 : i1 to i32
    %c0_i32_0 = arith.constant 0 : i32
    %2 = arith.cmpi ne, %1, %c0_i32_0 : i32
    scf.if %2 {
      %cst_14 = arith.constant 0.000000e+00 : f32
      %38 = vector.broadcast %cst_14 : f32 to vector<1x2x1024xf32>
      %c0_15 = arith.constant 0 : index
      %c0_16 = arith.constant 0 : index
      %c0_17 = arith.constant 0 : index
      %39 = vector.load %arg4[%c0_15, %c0_16, %c0_17] : memref<1x2x1024xf32, #tpu.memory_space<vmem>>, vector<1x2x1024xf32>
      tpu.vector_store %arg4[%c0_15, %c0_16, %c0_17], %38 {strides = array<i32>} : memref<1x2x1024xf32, #tpu.memory_space<vmem>>, vector<1x2x1024xf32>,
    } else {
    }
    %c1_i32 = arith.constant 1 : i32
    %3 = arith.muli %arg0, %c1_i32 : i32
    %4 = arith.addi %3, %arg1 : i32
    %c1_i32_1 = arith.constant 1 : i32
    %5 = arith.cmpi sge, %4, %c1_i32_1 : i32
    %c2048_i32 = arith.constant 2048 : i32
    %6 = arith.muli %4, %c2048_i32 : i32
    %c0 = arith.constant 0 : index
    %c0_2 = arith.constant 0 : index
    %7 = vector.load %arg2[%c0, %c0_2] : memref<2x1024xf32, #tpu.memory_space<vmem>>, vector<2x1024xf32>
    %c0_3 = arith.constant 0 : index
    %c0_4 = arith.constant 0 : index
    %8 = vector.load %arg3[%c0_3, %c0_4] : memref<2x1024xf32, #tpu.memory_space<vmem>>, vector<2x1024xf32>
    %cst = arith.constant 0.000000e+00 : f32
    %9 = vector.broadcast %cst : f32 to vector<2x1024xf32>
    %10 = arith.maximumf %7, %9 : vector<2x1024xf32>
    %11 = arith.mulf %7, %8 : vector<2x1024xf32>
    %12 = arith.subf %10, %11 : vector<2x1024xf32>
    %13 = math.absf %7 : vector<2x1024xf32>
    %cst_5 = arith.constant 0.000000e+00 : f32
    %14 = vector.broadcast %cst_5 : f32 to vector<2x1024xf32>
    %15 = arith.subf %14, %13 : vector<2x1024xf32>
    %16 = math.exp %15 : vector<2x1024xf32>
    %17 = math.log1p %16 : vector<2x1024xf32>
    %18 = arith.addf %12, %17 : vector<2x1024xf32>
    %cst_6 = arith.constant 0.000000e+00 : f32
    %19 = vector.broadcast %cst_6 : f32 to vector<2x1024xf32>
    %20 = arith.subf %19, %18 : vector<2x1024xf32>
    %21 = math.exp %20 : vector<2x1024xf32>
    %cst_7 = arith.constant 1.000000e+00 : f32
    %22 = vector.broadcast %cst_7 : f32 to vector<2x1024xf32>
    %23 = arith.subf %22, %21 : vector<2x1024xf32>
    %cst_8 = arith.constant 2.375000e-01 : f32
    %24 = vector.broadcast %cst_8 : f32 to vector<2x1024xf32>
    %25 = arith.mulf %24, %23 : vector<2x1024xf32>
    %26 = arith.mulf %25, %23 : vector<2x1024xf32>
    %cst_9 = arith.constant 5.000000e-02 : f32
    %27 = vector.broadcast %cst_9 : f32 to vector<2x1024xf32>
    %28 = arith.addf %26, %27 : vector<2x1024xf32>
    %29 = arith.mulf %18, %28 : vector<2x1024xf32>
    %c2048_i32_10 = arith.constant 2048 : i32
    %30 = arith.addi %6, %c2048_i32_10 : i32
    %c2048_i32_11 = arith.constant 2048 : i32
    %31 = arith.cmpi sgt, %30, %c2048_i32_11 : i32
    %32 = arith.ori %5, %31 : i1
    %true = arith.constant true
    %33 = arith.xori %32, %true : i1
    %34 = arith.extui %33 : i1 to i32
    %c0_i32_12 = arith.constant 0 : i32
    %35 = arith.cmpi ne, %34, %c0_i32_12 : i32
    scf.if %35 {
      %c0_14 = arith.constant 0 : index
      %c0_15 = arith.constant 0 : index
      %c0_16 = arith.constant 0 : index
      %38 = vector.load %arg4[%c0_14, %c0_15, %c0_16] : memref<1x2x1024xf32, #tpu.memory_space<vmem>>, vector<1x2x1024xf32>
      %39 = vector.shape_cast %29 : vector<2x1024xf32> to vector<1x2x1024xf32>
      %cst_17 = arith.constant dense<0.000000e+00> : vector<2x1024xf32>
      %40 = vector.multi_reduction <add>, %39, %cst_17 [0] : vector<1x2x1024xf32> to vector<2x1024xf32>
      %41 = vector.shape_cast %40 : vector<2x1024xf32> to vector<1x2x1024xf32>
      %42 = arith.addf %38, %41 : vector<1x2x1024xf32>
      %c0_18 = arith.constant 0 : index
      %c0_19 = arith.constant 0 : index
      %c0_20 = arith.constant 0 : index
      %43 = vector.load %arg4[%c0_18, %c0_19, %c0_20] : memref<1x2x1024xf32, #tpu.memory_space<vmem>>, vector<1x2x1024xf32>
      tpu.vector_store %arg4[%c0_18, %c0_19, %c0_20], %42 {strides = array<i32>} : memref<1x2x1024xf32, #tpu.memory_space<vmem>>, vector<1x2x1024xf32>,
    } else {
    }
    %36 = arith.extui %32 : i1 to i32
    %c0_i32_13 = arith.constant 0 : i32
    %37 = arith.cmpi ne, %36, %c0_i32_13 : i32
    scf.if %37 {
      %38 = tpu.iota {dimensions = array<i32: 0>} : vector<2x1024xi32>
      %39 = tpu.iota {dimensions = array<i32: 1>} : vector<2x1024xi32>
      %c1024_i32 = arith.constant 1024 : i32
      %40 = vector.broadcast %c1024_i32 : i32 to vector<2x1024xi32>
      %41 = arith.muli %38, %40 : vector<2x1024xi32>
      %42 = arith.addi %41, %39 : vector<2x1024xi32>
      %c2048_i32_14 = arith.constant 2048 : i32
      %43 = arith.subi %c2048_i32_14, %6 : i32
      %44 = vector.broadcast %43 : i32 to vector<2x1024xi32>
      %45 = arith.cmpi slt, %42, %44 : vector<2x1024xi32>
      %true_15 = arith.constant true
      %46 = arith.xori %5, %true_15 : i1
      %47 = vector.broadcast %46 : i1 to vector<2x1024xi1>
      %48 = arith.andi %45, %47 : vector<2x1024xi1>
      %cst_16 = arith.constant 0.000000e+00 : f32
      %49 = vector.broadcast %cst_16 : f32 to vector<2x1024xf32>
      %50 = arith.select %48, %29, %49 : vector<2x1024xi1>, vector<2x1024xf32>
      %c0_17 = arith.constant 0 : index
      %c0_18 = arith.constant 0 : index
      %c0_19 = arith.constant 0 : index
      %51 = vector.load %arg4[%c0_17, %c0_18, %c0_19] : memref<1x2x1024xf32, #tpu.memory_space<vmem>>, vector<1x2x1024xf32>
      %52 = vector.shape_cast %50 : vector<2x1024xf32> to vector<1x2x1024xf32>
      %cst_20 = arith.constant dense<0.000000e+00> : vector<2x1024xf32>
      %53 = vector.multi_reduction <add>, %52, %cst_20 [0] : vector<1x2x1024xf32> to vector<2x1024xf32>
      %54 = vector.shape_cast %53 : vector<2x1024xf32> to vector<1x2x1024xf32>
      %55 = arith.addf %51, %54 : vector<1x2x1024xf32>
      %c0_21 = arith.constant 0 : index
      %c0_22 = arith.constant 0 : index
      %c0_23 = arith.constant 0 : index
      %56 = vector.load %arg4[%c0_21, %c0_22, %c0_23] : memref<1x2x1024xf32, #tpu.memory_space<vmem>>, vector<1x2x1024xf32>
      tpu.vector_store %arg4[%c0_21, %c0_22, %c0_23], %55 {strides = array<i32>} : memref<1x2x1024xf32, #tpu.memory_space<vmem>>, vector<1x2x1024xf32>,
    } else {
    }
    return
  }
  func.func @transform_0(%arg0: i32, %arg1: i32) -> (i32, i32) {
    %c1_i32 = arith.constant 1 : i32
    %0 = arith.muli %arg0, %c1_i32 : i32
    %1 = arith.addi %0, %arg1 : i32
    %c0_i32 = arith.constant 0 : i32
    %c0_i32_0 = arith.constant 0 : i32
    return %1, %c0_i32 : i32, i32
  }
  func.func @transform_1(%arg0: i32, %arg1: i32) -> (i32, i32) {
    %c1_i32 = arith.constant 1 : i32
    %0 = arith.muli %arg0, %c1_i32 : i32
    %1 = arith.addi %0, %arg1 : i32
    %c0_i32 = arith.constant 0 : i32
    %c0_i32_0 = arith.constant 0 : i32
    return %1, %c0_i32 : i32, i32
  }
  func.func @transform_2(%arg0: i32, %arg1: i32) -> (i32, i32, i32) {
    %c0_i32 = arith.constant 0 : i32
    %c0_i32_0 = arith.constant 0 : i32
    %c0_i32_1 = arith.constant 0 : i32
    return %arg0, %c0_i32, %c0_i32_0 : i32, i32, i32
  }
}

</mosaic_0001>

<llo_original>
// kernel: tpu_custom_call.1
$region0: #{tpu_custom_call.1}
  #allocation0 [shape = 'u32[]', space=smem, size = 0x4, offset = 0x4, fixed_abs, tag = 'smem constant byte address 0x4 - core index']
  #allocation1 [shape = 'u32[144,128]{1,0:T(1,128)}', space=vmem, size = 0x12000, scoped, tag = 'internal scratch']
  %s0 = inlined_call_operand.hbm [shape: f32[2,1024], index: 0, kind: input, shape index: {}]
  %s1 = inlined_call_operand.hbm [shape: f32[2,1024], index: 1, kind: input, shape index: {}]
  %s2 = inlined_call_operand.hbm [shape: f32[1,2,1024], index: 2, kind: output, shape index: {}]
  %s3 = sld [smem:[#allocation0]]
  $region38: #{tpu_custom_call.1} parent=0
    _
  %s5 = ssub.s32 1, %s3
  %s6 = scalar_select 0, %s5, %s3
  $region1: #{tpu_custom_call.1} parent=0
    #allocation2 [shape = 'u8[8192]{0}', space=vmem, size = 0x2000, scoped, tag = 'input window, operand 0, single buffered']
    #allocation3 [shape = 's32[1]{0}', space=sflag, size = 0x4, scoped, tag = 'scoped memory for tpu_custom_call.1']
    #allocation4 [shape = 's32[1]{0}', space=sflag, size = 0x4, scoped, tag = 'scoped memory for tpu_custom_call.1']
    #allocation5 [shape = 'u8[8192]{0}', space=vmem, size = 0x2000, scoped, tag = 'input window, operand 1, single buffered']
    #allocation6 [shape = 's32[1]{0}', space=sflag, size = 0x4, scoped, tag = 'scoped memory for tpu_custom_call.1']
    #allocation7 [shape = 'u8[8192]{0}', space=vmem, size = 0x2000, scoped, tag = 'output window, operand 0, single buffered']
    %7 = vsyncpa [#allocation3], 0
    %8 = vsyncpa [#allocation6], 0
    %9 = vsyncpa [#allocation4], 0
    // Predicated region
    $region2: #{tpu_custom_call.1} parent=1 // pred_check
      _
    $region3: #{tpu_custom_call.1} parent=1 // pred_check_branch
      %11 = sbr.rel (0) target = $region5
    $region4: #{tpu_custom_call.1} parent=1 // pred_region
      %s12 = sadd.s32 0, 0
      %s14 = ssub.s32 256, 256
      %15 = vsyncadd [#allocation3], %s14
      %s16 = smul.addr %s12, 8
      %s17 = smul.addr %s16, 32
      %s18 = scalar_lea.hbm %s0, %s17
      %s20 = sshll.u32 [#allocation2], 4
      %s21 = int_to_ptr.vmem [resolvable:$true] %s20
      %23 = dma.hbm_to_vmem [thread:$0]  %s18, 256, %s21, [#allocation3]
    $region5: #{tpu_custom_call.1} parent=1 // pred_fallthru
      _
    // Predicated region
    $region6: #{tpu_custom_call.1} parent=1 // pred_check
      _
    $region7: #{tpu_custom_call.1} parent=1 // pred_check_branch
      %25 = sbr.rel (0) target = $region9
    $region8: #{tpu_custom_call.1} parent=1 // pred_region
      %s26 = sadd.s32 0, 0
      %s28 = ssub.s32 256, 256
      %29 = vsyncadd [#allocation6], %s28
      %s30 = smul.addr %s26, 8
      %s31 = smul.addr %s30, 32
      %s32 = scalar_lea.hbm %s1, %s31
      %s34 = sshll.u32 [#allocation5], 4
      %s35 = int_to_ptr.vmem [resolvable:$true] %s34
      %37 = dma.hbm_to_vmem [thread:$0]  %s32, 256, %s35, [#allocation6]
    $region9: #{tpu_custom_call.1} parent=1 // pred_fallthru
      _
    // Predicated region
    $region10: #{tpu_custom_call.1} parent=1 // pred_check
      _
    $region11: #{tpu_custom_call.1} parent=1 // pred_check_branch
      %39 = sbr.rel (0) target = $region13
    $region12: #{tpu_custom_call.1} parent=1 // pred_region
      %40 = dma.done [#allocation3], 256
    $region13: #{tpu_custom_call.1} parent=1 // pred_fallthru
      _
    // Predicated region
    $region14: #{tpu_custom_call.1} parent=1 // pred_check
      _
    $region15: #{tpu_custom_call.1} parent=1 // pred_check_branch
      %42 = sbr.rel (0) target = $region17
    $region16: #{tpu_custom_call.1} parent=1 // pred_region
      %43 = dma.done [#allocation6], 256
    $region17: #{tpu_custom_call.1} parent=1 // pred_fallthru
      _
    %s44 = sadd.s32 0, 0
    %s45 = sadd.s32 0, 0
    %p46 = scmp.eq.s32.totalorder 0, 0
    // Predicated region
    $region18: #{tpu_custom_call.1} parent=1 // pred_check
      %p47 = pneg %p46
    $region19: #{tpu_custom_call.1} parent=1 // pred_check_branch
      %49 = sbr.rel (%p47) target = $region21
    $region20: #{tpu_custom_call.1} parent=1 // pred_region
      %50 = vst [vmem:[#allocation7] sm:$0xff] 0.0
      %51 = vst [vmem:[#allocation7 + $0x8] sm:$0xff] 0.0
    $region21: #{tpu_custom_call.1} parent=1 // pred_fallthru
      _
    %s52 = sadd.s32 0, 0
    %p53 = scmp.ge.s32.totalorder %s52, 1
    %s54 = smul.u32 %s52, 2048
    %v55 = vld [vmem:[#allocation2] sm:$0xff]
    %v56 = vld [vmem:[#allocation2 + $0x8] sm:$0xff]
    %v57 = vld [vmem:[#allocation5] sm:$0xff]
    %v58 = vld [vmem:[#allocation5 + $0x8] sm:$0xff]
    %v59 = vmax.f32 %v55, 0.0
    %v60 = vmax.f32 %v56, 0.0
    %v61 = vmul.f32 %v55, %v57
    %v62 = vmul.f32 %v56, %v58
    %v63 = vsub.f32 %v59, %v61
    %v64 = vsub.f32 %v60, %v62
    %v65 = vand.u32 2147483647, %v55
    %v66 = vand.u32 2147483647, %v56
    %v67 = vsub.f32 0.0, %v65
    %v68 = vsub.f32 0.0, %v66
    %v69 = vmul.f32 %v67, 1.442695
    %v70 = vpow.pop %v69
    %v71 = vmul.f32 %v68, 1.442695
    %v72 = vpow.pop %v71
    %v73 = vadd.f32 %v70, 1.0
    %v74 = vlog2.pop %v73
    %v75 = vmul.f32 %v74, 0.6931472
    %v76 = vmul.f32 -0.5, %v70
    %v77 = vadd.f32 %v76, 1.0
    %v78 = vmul.f32 %v77, %v70
    %v79 = vand.u32 2147483647, %v70
    %vm80 = vcmp.lt.f32.partialorder %v79, 0.0004427343
    %v81 = vsel %vm80, %v78, %v75
    %v82 = vadd.f32 %v72, 1.0
    %v83 = vlog2.pop %v82
    %v84 = vmul.f32 %v83, 0.6931472
    %v85 = vmul.f32 -0.5, %v72
    %v86 = vadd.f32 %v85, 1.0
    %v87 = vmul.f32 %v86, %v72
    %v88 = vand.u32 2147483647, %v72
    %vm89 = vcmp.lt.f32.partialorder %v88, 0.0004427343
    %v90 = vsel %vm89, %v87, %v84
    %v91 = vadd.f32 %v63, %v81
    %v92 = vadd.f32 %v64, %v90
    %v93 = vsub.f32 0.0, %v91
    %v94 = vsub.f32 0.0, %v92
    %v95 = vmul.f32 %v93, 1.442695
    %v96 = vpow.pop %v95
    %v97 = vmul.f32 %v94, 1.442695
    %v98 = vpow.pop %v97
    %v99 = vsub.f32 1.0, %v96
    %v100 = vsub.f32 1.0, %v98
    %v101 = vmul.f32 %v99, 0.2375
    %v102 = vmul.f32 %v100, 0.2375
    %v103 = vmul.f32 %v101, %v99
    %v104 = vmul.f32 %v102, %v100
    %v105 = vadd.f32 %v103, 0.05
    %v106 = vadd.f32 %v104, 0.05
    %v107 = vmul.f32 %v91, %v105
    %v108 = vmul.f32 %v92, %v106
    %s109 = sadd.s32 %s54, 2048
    %p110 = scmp.gt.s32.totalorder %s109, 2048
    %p111 = por %p53, %p110
    // Predicated region
    $region22: #{tpu_custom_call.1} parent=1 // pred_check
      %p112 = pneg %p111
    $region23: #{tpu_custom_call.1} parent=1 // pred_check_branch
      %114 = sbr.rel (%p112) target = $region25
    $region24: #{tpu_custom_call.1} parent=1 // pred_region
      %v115 = vlaneseq
      %v116 = vshrl.u32 %v115, 7
      %v117 = vlaneseq
      %v118 = vand.u32 %v117, 127
      %v119 = vadd.s32 %v118, 128
      %v120 = vadd.s32 %v118, 256
      %v121 = vadd.s32 %v118, 384
      %v122 = vadd.s32 %v118, 512
      %v123 = vadd.s32 %v118, 640
      %v124 = vadd.s32 %v118, 768
      %v125 = vadd.s32 %v118, 896
      %v126 = vmul.u32 %v116, 1024
      %v127 = vadd.s32 %v126, %v118
      %v128 = vadd.s32 %v126, %v119
      %v129 = vadd.s32 %v126, %v120
      %v130 = vadd.s32 %v126, %v121
      %v131 = vadd.s32 %v126, %v122
      %v132 = vadd.s32 %v126, %v123
      %v133 = vadd.s32 %v126, %v124
      %v134 = vadd.s32 %v126, %v125
      %s135 = ssub.s32 2048, %s54
      %v136 = vstv %s135
      %vm137 = vcmp.lt.s32.totalorder %v127, %v136
      %vm138 = vcmp.lt.s32.totalorder %v128, %v136
      %vm139 = vcmp.lt.s32.totalorder %v129, %v136
      %vm140 = vcmp.lt.s32.totalorder %v130, %v136
      %vm141 = vcmp.lt.s32.totalorder %v131, %v136
      %vm142 = vcmp.lt.s32.totalorder %v132, %v136
      %vm143 = vcmp.lt.s32.totalorder %v133, %v136
      %vm144 = vcmp.lt.s32.totalorder %v134, %v136
      %p145 = scmp.lt.s32.totalorder %s52, 1
      %s146 = scalar_select %p145, 1, 0
      %v147 = vstv %s146
      %vm148 = vcmp.eq.s32.totalorder %v147, 1
      %vm149 = vmand %vm137, %vm148
      %vm150 = vmand %vm138, %vm148
      %vm151 = vmand %vm139, %vm148
      %vm152 = vmand %vm140, %vm148
      %vm153 = vmand %vm141, %vm148
      %vm154 = vmand %vm142, %vm148
      %vm155 = vmand %vm143, %vm148
      %vm156 = vmand %vm144, %vm148
      %v159 = vcombine.high %v107, %v107
      %v161 = vunpack.c.l.s4 1983009808
      %v162 = vunpack.c.0.s8 %v161
      %v163 = vlaneseq
      %v164 = vshrl.u32 %v163, 7
      %v165 = vsub.s32 %v162, %v164
      %v166 = vrot.slane %v107, %v165
      %v168 = vunpack.c.l.s4 1983009808
      %v169 = vunpack.c.0.s8 %v168
      %v170 = vlaneseq
      %v171 = vshrl.u32 %v170, 7
      %v172 = vsub.s32 %v169, %v171
      %v173 = vrot.slane %v159, %v172
      %v174 = vcombine.high %v166, %v166
      %v175 = vcombine.high %v173, %v173
      %v176 = vcombine.high %v108, %v108
      %v178 = vunpack.c.l.s4 1983009808
      %v179 = vunpack.c.0.s8 %v178
      %v180 = vlaneseq
      %v181 = vshrl.u32 %v180, 7
      %v182 = vsub.s32 %v179, %v181
      %v183 = vrot.slane %v108, %v182
      %v185 = vunpack.c.l.s4 1983009808
      %v186 = vunpack.c.0.s8 %v185
      %v187 = vlaneseq
      %v188 = vshrl.u32 %v187, 7
      %v189 = vsub.s32 %v186, %v188
      %v190 = vrot.slane %v176, %v189
      %v191 = vcombine.high %v183, %v183
      %v192 = vcombine.high %v190, %v190
      %v201 = vsel %vm149, %v166, 0.0
      %v202 = vsel %vm150, %v174, 0.0
      %v203 = vsel %vm151, %v173, 0.0
      %v204 = vsel %vm152, %v175, 0.0
      %v205 = vsel %vm153, %v183, 0.0
      %v206 = vsel %vm154, %v191, 0.0
      %v207 = vsel %vm155, %v190, 0.0
      %v208 = vsel %vm156, %v192, 0.0
      %v209 = vld [vmem:[#allocation7] sm:$0xff]
      %v210 = vld [vmem:[#allocation7 + $0x8] sm:$0xff]
      %v211 = vadd.f32 %v201, 0.0
      %v212 = vadd.f32 %v202, 0.0
      %v213 = vadd.f32 %v203, 0.0
      %v214 = vadd.f32 %v204, 0.0
      %v215 = vadd.f32 %v205, 0.0
      %v216 = vadd.f32 %v206, 0.0
      %v217 = vadd.f32 %v207, 0.0
      %v218 = vadd.f32 %v208, 0.0
      %v227 = vcombine.low %v211, %v212
      %v228 = vcombine.low %v213, %v214
      %v230 = vunpack.c.l.s4 1983009808
      %v231 = vunpack.c.0.s8 %v230
      %v232 = vlaneseq
      %v233 = vshrl.u32 %v232, 7
      %v234 = vsub.s32 %v231, %v233
      %v235 = vrot.slane %v227, %v234
      %v237 = vunpack.c.l.s4 1983009808
      %v238 = vunpack.c.0.s8 %v237
      %v239 = vlaneseq
      %v240 = vshrl.u32 %v239, 7
      %v241 = vsub.s32 %v238, %v240
      %v242 = vrot.slane %v228, %v241
      %v243 = vcombine.low %v235, %v242
      %v244 = vcombine.low %v215, %v216
      %v245 = vcombine.low %v217, %v218
      %v247 = vunpack.c.l.s4 1983009808
      %v248 = vunpack.c.0.s8 %v247
      %v249 = vlaneseq
      %v250 = vshrl.u32 %v249, 7
      %v251 = vsub.s32 %v248, %v250
      %v252 = vrot.slane %v244, %v251
      %v254 = vunpack.c.l.s4 1983009808
      %v255 = vunpack.c.0.s8 %v254
      %v256 = vlaneseq
      %v257 = vshrl.u32 %v256, 7
      %v258 = vsub.s32 %v255, %v257
      %v259 = vrot.slane %v245, %v258
      %v260 = vcombine.low %v252, %v259
      %v263 = vadd.f32 %v209, %v243
      %v264 = vadd.f32 %v210, %v260
      %265 = vst [vmem:[#allocation7] sm:$0xff] %v263
      %266 = vst [vmem:[#allocation7 + $0x8] sm:$0xff] %v264
    $region25: #{tpu_custom_call.1} parent=1 // pred_fallthru
      _
    %p267 = pneg %p111
    // Predicated region
    $region26: #{tpu_custom_call.1} parent=1 // pred_check
      _
    $region27: #{tpu_custom_call.1} parent=1 // pred_check_branch
      %269 = sbr.rel (%p111) target = $region29
    $region28: #{tpu_custom_call.1} parent=1 // pred_region
      %v270 = vld [vmem:[#allocation7] sm:$0xff]
      %v271 = vld [vmem:[#allocation7 + $0x8] sm:$0xff]
      %v272 = vadd.f32 %v107, 0.0
      %v273 = vadd.f32 %v108, 0.0
      %v274 = vadd.f32 %v270, %v272
      %v275 = vadd.f32 %v271, %v273
      %276 = vst [vmem:[#allocation7] sm:$0xff] %v274
      %277 = vst [vmem:[#allocation7 + $0x8] sm:$0xff] %v275
    $region29: #{tpu_custom_call.1} parent=1 // pred_fallthru
      _
    // Predicated region
    $region30: #{tpu_custom_call.1} parent=1 // pred_check
      _
    $region31: #{tpu_custom_call.1} parent=1 // pred_check_branch
      %279 = sbr.rel (0) target = $region33
    $region32: #{tpu_custom_call.1} parent=1 // pred_region
      %s281 = ssub.s32 256, 256
      %282 = vsyncadd [#allocation4], %s281
      %s284 = sshll.u32 [#allocation7], 4
      %s285 = int_to_ptr.vmem [resolvable:$true] %s284
      %287 = dma.vmem_to_hbm [thread:$0]  %s285, 256, %s2, [#allocation4]
    $region33: #{tpu_custom_call.1} parent=1 // pred_fallthru
      _
    // Predicated region
    $region34: #{tpu_custom_call.1} parent=1 // pred_check
      _
    $region35: #{tpu_custom_call.1} parent=1 // pred_check_branch
      %289 = sbr.rel (0) target = $region37
    $region36: #{tpu_custom_call.1} parent=1 // pred_region
      %290 = dma.done [#allocation4], 256
    $region37: #{tpu_custom_call.1} parent=1 // pred_fallthru
      _
    %291 = vsyncpa [#allocation3], 1
    %292 = vsyncpa [#allocation6], 1
    %293 = vsyncpa [#allocation4], 1

</llo_original>
